<compile_context>
chip_gen: v6e
topology: v6e:2x2x1
jax: 0.10.0
libtpu: 0.0.40
codegen_flags: <defaults>
</compile_context>

<pallas_src>
import jax
import jax.numpy as jnp
from jax.experimental import pallas as pl
from jax.experimental.pallas import tpu as pltpu

LANE = 128
VMEM_BUDGET = 20 << 20   # conservative double-buffered working-set target


def _cdiv(a, b):
    return -(-a // b)


def _round_up(x, m):
    return _cdiv(x, m) * m


# ---------------------------------------------------------------------------
# Kernel: two-stream K-tiled matmul accumulated directly into the resident
# f32 output block.  grid = (batch tiles ["parallel"], K steps ["arbitrary"]).
#   mel_ref : (tb, tk_m) f32     w_mel_ref : (tk_m, c_pad) bf16
#   stft_ref: (tb, tk_s) f32     w_stft_ref: (tk_s, c_pad) bf16
#   b_ref   : (1, c_pad) f32     out_ref   : (tb, c_pad) f32 (resident over K)
# ---------------------------------------------------------------------------
def ensemble_kernel(mel_ref, stft_ref, w_mel_ref, w_stft_ref, b_ref, out_ref):
    k = pl.program_id(1)

    @pl.when(k == 0)
    def _():
        # Initialize the resident output with the folded bias (epilogue-free).
        out_ref[...] = jnp.broadcast_to(b_ref[...], out_ref.shape)

    # Cast f32 activation tiles to bf16 in-kernel (MXU accumulates in f32).
    out_ref[...] += (
        jnp.dot(mel_ref[...].astype(jnp.bfloat16), w_mel_ref[...],
                preferred_element_type=jnp.float32)
        + jnp.dot(stft_ref[...].astype(jnp.bfloat16), w_stft_ref[...],
                  preferred_element_type=jnp.float32))


# ---------------------------------------------------------------------------
# Offline weight prep: fold fc into each sub-model Linear, pad classes to a
# full 128-lane register, cast weights to bf16.  (K padding, if any, is done
# per-call once the tiling is known.)
# ---------------------------------------------------------------------------
def fuse_params(params):
    C = params["b_fc"].shape[-1]
    hp = jax.lax.Precision.HIGHEST
    w_fc_mel = params["w_fc"][:, :C].T      # (C, C)
    w_fc_stft = params["w_fc"][:, C:].T     # (C, C)

    w_mel_f = jnp.dot(params["w_mel"], w_fc_mel, precision=hp)      # (F_mel, C)
    w_stft_f = jnp.dot(params["w_stft"], w_fc_stft, precision=hp)   # (F_stft, C)
    b_f = (jnp.dot(params["b_mel"], w_fc_mel, precision=hp)
           + jnp.dot(params["b_stft"], w_fc_stft, precision=hp)
           + params["b_fc"])                                        # (1, C)

    c_pad = _round_up(C, LANE)
    padc = ((0, 0), (0, c_pad - C))
    return {
        "w_mel": jnp.pad(w_mel_f, padc).astype(jnp.bfloat16),
        "w_stft": jnp.pad(w_stft_f, padc).astype(jnp.bfloat16),
        "b": jnp.pad(b_f, padc).astype(jnp.float32),
        "num_classes": C,
    }


# ---------------------------------------------------------------------------
# Tiling policies.
# ---------------------------------------------------------------------------
def _pick_batch_tiling(B, tb_max=256):
    """Return (b_pad, tb).  tb divides b_pad; once B >= 16 there are >= 2
    programs on the parallel axis so both v7x TensorCores get work."""
    if B < 16:
        return B, B                       # full-dim block, no batch padding
    nprog = max(2, _cdiv(B, tb_max))
    tb = _round_up(_cdiv(B, nprog), 8)
    return _round_up(B, tb), tb


def _pick_k_tiling(f_mel, f_stft, tb, c_pad):
    """Return (n_k, tk_mel, fpad_mel, tk_stft, fpad_stft).  Uses a single K
    step (full-dim blocks, zero padding) whenever the double-buffered working
    set fits VMEM_BUDGET; otherwise 128-aligned K tiles with minimal waste."""
    per_k = 2 * (tb * 4 + c_pad * 2)              # bytes / K element / stream
    tk_max = max(512, (VMEM_BUDGET // (2 * per_k)) // LANE * LANE)
    n_k = max(_cdiv(f_mel, tk_max), _cdiv(f_stft, tk_max))

    def tile(f):
        if n_k == 1:
            return f, f                            # full reduction, no padding
        tk = _round_up(_cdiv(f, n_k), LANE)
        return tk, n_k * tk

    tk_m, fpad_m = tile(f_mel)
    tk_s, fpad_s = tile(f_stft)
    return n_k, tk_m, fpad_m, tk_s, fpad_s


# ---------------------------------------------------------------------------
# Wrapper: flatten (torch .view semantics), tile, launch.
# ---------------------------------------------------------------------------
def ensemble_forward(mel_input, stft_input, fused):
    w_mel, w_stft, bias = fused["w_mel"], fused["w_stft"], fused["b"]
    C = fused["num_classes"]
    c_pad = bias.shape[-1]

    B = mel_input.shape[0]
    mel = mel_input.reshape(B, -1)                 # no-copy reshape
    stft = stft_input.reshape(B, -1)
    f_mel, f_stft = mel.shape[1], stft.shape[1]

    b_pad, tb = _pick_batch_tiling(B)
    n_k, tk_m, fpad_m, tk_s, fpad_s = _pick_k_tiling(f_mel, f_stft, tb, c_pad)

    # Only pad when strictly required (common case: no activation copies).
    if b_pad != B or fpad_m != f_mel:
        mel = jnp.pad(mel, ((0, b_pad - B), (0, fpad_m - f_mel)))
    if b_pad != B or fpad_s != f_stft:
        stft = jnp.pad(stft, ((0, b_pad - B), (0, fpad_s - f_stft)))
    if fpad_m != w_mel.shape[0]:
        w_mel = jnp.pad(w_mel, ((0, fpad_m - w_mel.shape[0]), (0, 0)))
    if fpad_s != w_stft.shape[0]:
        w_stft = jnp.pad(w_stft, ((0, fpad_s - w_stft.shape[0]), (0, 0)))

    # Actual per-step VMEM footprint (double-buffered) -> explicit limit,
    # safe on v7x (64 MiB physical / 32 MiB default scoped).
    vmem_bytes = (2 * tb * (tk_m + tk_s) * 4       # f32 activation tiles
                  + 2 * (tk_m + tk_s) * c_pad * 2  # bf16 weight tiles
                  + 2 * c_pad * 4                  # bias
                  + 2 * tb * c_pad * 4)            # resident f32 output
    vmem_limit = int(min(48 << 20, max(2 * vmem_bytes, 16 << 20)))

    grid = (b_pad // tb, n_k)
    out = pl.pallas_call(
        ensemble_kernel,
        out_shape=jax.ShapeDtypeStruct((b_pad, c_pad), jnp.float32),
        grid_spec=pltpu.PrefetchScalarGridSpec(
            num_scalar_prefetch=0,
            grid=grid,
            in_specs=[
                pl.BlockSpec((tb, tk_m), lambda i, k: (i, k)),      # mel acts
                pl.BlockSpec((tb, tk_s), lambda i, k: (i, k)),      # stft acts
                pl.BlockSpec((tk_m, c_pad), lambda i, k: (k, 0)),   # mel W
                pl.BlockSpec((tk_s, c_pad), lambda i, k: (k, 0)),   # stft W
                pl.BlockSpec((1, c_pad), lambda i, k: (0, 0)),      # bias
            ],
            out_specs=pl.BlockSpec((tb, c_pad), lambda i, k: (i, 0)),
        ),
        compiler_params=pltpu.CompilerParams(
            dimension_semantics=("parallel", "arbitrary"),
            vmem_limit_bytes=vmem_limit),
    )(mel, stft, w_mel, w_stft, bias)
    return out[:B, :C]


# ---------------------------------------------------------------------------
# Torch-equivalent parameters + pure-JAX references.
# ---------------------------------------------------------------------------
def init_params(key, f_mel, f_stft, num_classes, scale=0.05):
    ks = jax.random.split(key, 6)
    return {
        # Sub-model linear classifiers, stored transposed: (F, C) for x @ W.
        "w_mel": scale * jax.random.normal(ks[0], (f_mel, num_classes), jnp.float32),
        "b_mel": scale * jax.random.normal(ks[1], (1, num_classes), jnp.float32),
        "w_stft": scale * jax.random.normal(ks[2], (f_stft, num_classes), jnp.float32),
        "b_stft": scale * jax.random.normal(ks[3], (1, num_classes), jnp.float32),
        # fc: torch.nn.Linear(2C -> C): weight (C, 2C), bias (C,)
        "w_fc": scale * jax.random.normal(ks[4], (num_classes, 2 * num_classes), jnp.float32),
        "b_fc": scale * jax.random.normal(ks[5], (1, num_classes), jnp.float32),
    }


def reference_forward(mel_input, stft_input, params, quantize=False):
    """Mirrors EnsembleModel.forward.  quantize=True rounds activations and the
    folded weights through bf16 (matching the kernel's storage dtypes) but does
    the math in full f32 — isolates MXU-accumulation differences."""
    hp = jax.lax.Precision.HIGHEST
    q = (lambda a: a.astype(jnp.bfloat16).astype(jnp.float32)) if quantize else (lambda a: a)
    B = mel_input.shape[0]
    mel_flat = q(mel_input.reshape(B, -1))
    stft_flat = q(stft_input.reshape(B, -1))
    C = params["b_fc"].shape[-1]
    w_fc_mel = params["w_fc"][:, :C].T
    w_fc_stft = params["w_fc"][:, C:].T
    if quantize:
        w_mel = q(jnp.dot(params["w_mel"], w_fc_mel, precision=hp))
        w_stft = q(jnp.dot(params["w_stft"], w_fc_stft, precision=hp))
        bias = (jnp.dot(params["b_mel"], w_fc_mel, precision=hp)
                + jnp.dot(params["b_stft"], w_fc_stft, precision=hp)
                + params["b_fc"])
        return (jnp.dot(mel_flat, w_mel, precision=hp)
                + jnp.dot(stft_flat, w_stft, precision=hp) + bias)
    mel_out = jnp.dot(mel_flat, params["w_mel"], precision=hp) + params["b_mel"]
    stft_out = jnp.dot(stft_flat, params["w_stft"], precision=hp) + params["b_stft"]
    combined = jnp.concatenate([mel_out, stft_out], axis=1)
    return jnp.dot(combined, params["w_fc"].T, precision=hp) + params["b_fc"]


if __name__ == "__main__":
    key = jax.random.PRNGKey(0)
    C, H, W = 4, 16, 16
    num_classes = 8

    k_mel, k_stft, k_params = jax.random.split(key, 3)
    params = init_params(k_params, C * H * W, C * H * W, num_classes)
    fused = fuse_params(params)

    for B in (2, 32):   # tiny batch (single program) + multi-program batch path
        km, ks = jax.random.fold_in(k_mel, B), jax.random.fold_in(k_stft, B)
        mel_input = jax.random.normal(km, (B, C, H, W), jnp.float32)
        stft_input = jax.random.normal(ks, (B, C, H, W), jnp.float32)

        out = ensemble_forward(mel_input, stft_input, fused)
        out = jax.block_until_ready(out)
        assert out.shape == (B, num_classes)

        # Tight check vs the bf16-quantized exact reference (same stored precision).
        ref_q = reference_forward(mel_input, stft_input, params, quantize=True)
        assert jnp.allclose(out, ref_q, atol=1e-3, rtol=1e-3), \
            (B, float(jnp.max(jnp.abs(out - ref_q))))

        # Looser check vs the original full-f32 module semantics.
        ref = reference_forward(mel_input, stft_input, params, quantize=False)
        assert jnp.allclose(out, ref, atol=1e-2, rtol=1e-2), \
            (B, float(jnp.max(jnp.abs(out - ref))))

    print("KERNEL_OK")
</pallas_src>

<mosaic_0001>
module attributes {stable_mosaic.version = 11 : i64} {
  func.func @ensemble_kernel(%arg0: i32, %arg1: i32, %arg2: memref<2x1024xf32, #tpu.memory_space<vmem>>, %arg3: memref<2x1024xf32, #tpu.memory_space<vmem>>, %arg4: memref<1024x128xbf16, #tpu.memory_space<vmem>>, %arg5: memref<1024x128xbf16, #tpu.memory_space<vmem>>, %arg6: memref<1x128xf32, #tpu.memory_space<vmem>>, %arg7: memref<2x128xf32, #tpu.memory_space<vmem>>) attributes {dimension_semantics = [#tpu.dimension_semantics<parallel>, #tpu.dimension_semantics<arbitrary>], iteration_bounds = array<i64: 1, 1>, scalar_prefetch = 0 : i64, scratch_operands = 0 : i64, tpu.core_type = #tpu.core_type<tc>, window_params = [{transform_indices = @transform_0, window_bounds = array<i64: 2, 1024>}, {transform_indices = @transform_1, window_bounds = array<i64: 2, 1024>}, {transform_indices = @transform_2, window_bounds = array<i64: 1024, 128>}, {transform_indices = @transform_3, window_bounds = array<i64: 1024, 128>}, {pipeline_mode = #tpu.pipeline_mode<synchronous>, transform_indices = @transform_4, window_bounds = array<i64: 1, 128>}, {transform_indices = @transform_5, window_bounds = array<i64: 2, 128>}]} {
    %c0_i32 = arith.constant 0 : i32
    %0 = arith.cmpi eq, %arg1, %c0_i32 : i32
    %1 = arith.extui %0 : i1 to i32
    %c0_i32_0 = arith.constant 0 : i32
    %2 = arith.cmpi ne, %1, %c0_i32_0 : i32
    scf.if %2 {
      %c0_13 = arith.constant 0 : index
      %c0_14 = arith.constant 0 : index
      %15 = vector.load %arg6[%c0_13, %c0_14] : memref<1x128xf32, #tpu.memory_space<vmem>>, vector<1x128xf32>
      %16 = vector.shape_cast %15 : vector<1x128xf32> to vector<1x128xf32>
      %17 = vector.broadcast %16 : vector<1x128xf32> to vector<2x128xf32>
      %c0_15 = arith.constant 0 : index
      %c0_16 = arith.constant 0 : index
      %18 = vector.load %arg7[%c0_15, %c0_16] : memref<2x128xf32, #tpu.memory_space<vmem>>, vector<2x128xf32>
      tpu.vector_store %arg7[%c0_15, %c0_16], %17 {strides = array<i32>} : memref<2x128xf32, #tpu.memory_space<vmem>>, vector<2x128xf32>,
    } else {
    }
    %c0 = arith.constant 0 : index
    %c0_1 = arith.constant 0 : index
    %3 = vector.load %arg7[%c0, %c0_1] : memref<2x128xf32, #tpu.memory_space<vmem>>, vector<2x128xf32>
    %c0_2 = arith.constant 0 : index
    %c0_3 = arith.constant 0 : index
    %4 = vector.load %arg2[%c0_2, %c0_3] : memref<2x1024xf32, #tpu.memory_space<vmem>>, vector<2x1024xf32>
    %5 = arith.truncf %4 : vector<2x1024xf32> to vector<2x1024xbf16>
    %c0_4 = arith.constant 0 : index
    %c0_5 = arith.constant 0 : index
    %6 = vector.load %arg4[%c0_4, %c0_5] : memref<1024x128xbf16, #tpu.memory_space<vmem>>, vector<1024x128xbf16>
    %cst = arith.constant dense<0.000000e+00> : vector<2x128xf32>
    %7 = tpu.matmul %5, %6, %cst {dimension_numbers = #tpu.dot_dimension_numbers<[1], [0], [0], [1], [0, 0, 1, 1], [], []>} : vector<2x1024xbf16>, vector<1024x128xbf16>, vector<2x128xf32> -> vector<2x128xf32>
    %c0_6 = arith.constant 0 : index
    %c0_7 = arith.constant 0 : index
    %8 = vector.load %arg3[%c0_6, %c0_7] : memref<2x1024xf32, #tpu.memory_space<vmem>>, vector<2x1024xf32>
    %9 = arith.truncf %8 : vector<2x1024xf32> to vector<2x1024xbf16>
    %c0_8 = arith.constant 0 : index
    %c0_9 = arith.constant 0 : index
    %10 = vector.load %arg5[%c0_8, %c0_9] : memref<1024x128xbf16, #tpu.memory_space<vmem>>, vector<1024x128xbf16>
    %cst_10 = arith.constant dense<0.000000e+00> : vector<2x128xf32>
    %11 = tpu.matmul %9, %10, %cst_10 {dimension_numbers = #tpu.dot_dimension_numbers<[1], [0], [0], [1], [0, 0, 1, 1], [], []>} : vector<2x1024xbf16>, vector<1024x128xbf16>, vector<2x128xf32> -> vector<2x128xf32>
    %12 = arith.addf %7, %11 : vector<2x128xf32>
    %13 = arith.addf %3, %12 : vector<2x128xf32>
    %c0_11 = arith.constant 0 : index
    %c0_12 = arith.constant 0 : index
    %14 = vector.load %arg7[%c0_11, %c0_12] : memref<2x128xf32, #tpu.memory_space<vmem>>, vector<2x128xf32>
    tpu.vector_store %arg7[%c0_11, %c0_12], %13 {strides = array<i32>} : memref<2x128xf32, #tpu.memory_space<vmem>>, vector<2x128xf32>,
    return
  }
  func.func @transform_0(%arg0: i32, %arg1: i32) -> (i32, i32) {
    %c0_i32 = arith.constant 0 : i32
    return %arg0, %arg1 : i32, i32
  }
  func.func @transform_1(%arg0: i32, %arg1: i32) -> (i32, i32) {
    %c0_i32 = arith.constant 0 : i32
    return %arg0, %arg1 : i32, i32
  }
  func.func @transform_2(%arg0: i32, %arg1: i32) -> (i32, i32) {
    %c0_i32 = arith.constant 0 : i32
    %c0_i32_0 = arith.constant 0 : i32
    return %arg1, %c0_i32 : i32, i32
  }
  func.func @transform_3(%arg0: i32, %arg1: i32) -> (i32, i32) {
    %c0_i32 = arith.constant 0 : i32
    %c0_i32_0 = arith.constant 0 : i32
    return %arg1, %c0_i32 : i32, i32
  }
  func.func @transform_4(%arg0: i32, %arg1: i32) -> (i32, i32) {
    %c0_i32 = arith.constant 0 : i32
    %c0_i32_0 = arith.constant 0 : i32
    %c0_i32_1 = arith.constant 0 : i32
    return %c0_i32, %c0_i32_0 : i32, i32
  }
  func.func @transform_5(%arg0: i32, %arg1: i32) -> (i32, i32) {
    %c0_i32 = arith.constant 0 : i32
    %c0_i32_0 = arith.constant 0 : i32
    return %arg0, %c0_i32 : i32, i32
  }
}

</mosaic_0001>

<llo_original>
// kernel: tpu_custom_call.1
$region0: #{tpu_custom_call.1}
  #allocation0 [shape = 'u32[]', space=smem, size = 0x4, offset = 0x4, fixed_abs, tag = 'smem constant byte address 0x4 - core index']
  #allocation1 [shape = 'u32[144,128]{1,0:T(1,128)}', space=vmem, size = 0x12000, scoped, tag = 'internal scratch']
  %s0 = inlined_call_operand.hbm [shape: f32[2,1024], index: 0, kind: input, shape index: {}]
  %s1 = inlined_call_operand.hbm [shape: f32[2,1024], index: 1, kind: input, shape index: {}]
  %s2 = inlined_call_operand.hbm [shape: bf16[1024,128], index: 2, kind: input, shape index: {}]
  %s3 = inlined_call_operand.hbm [shape: bf16[1024,128], index: 3, kind: input, shape index: {}]
  %s4 = inlined_call_operand.vmem [shape: f32[1,128], index: 4, kind: input, shape index: {}]
  %s5 = inlined_call_operand.hbm [shape: f32[2,128], index: 5, kind: output, shape index: {}]
  %s6 = sld [smem:[#allocation0]]
  $region50: #{tpu_custom_call.1} parent=0
    _
  %s8 = ssub.s32 1, %s6
  %s9 = scalar_select 0, %s8, %s6
  $region1: #{tpu_custom_call.1} parent=0
    #allocation2 [shape = 'u8[8192]{0}', space=vmem, size = 0x2000, scoped, tag = 'input window, operand 0, single buffered']
    #allocation3 [shape = 's32[1]{0}', space=sflag, size = 0x4, scoped, tag = 'scoped memory for tpu_custom_call.1']
    #allocation4 [shape = 's32[1]{0}', space=sflag, size = 0x4, scoped, tag = 'scoped memory for tpu_custom_call.1']
    #allocation5 [shape = 'u8[8192]{0}', space=vmem, size = 0x2000, scoped, tag = 'input window, operand 1, single buffered']
    #allocation6 [shape = 's32[1]{0}', space=sflag, size = 0x4, scoped, tag = 'scoped memory for tpu_custom_call.1']
    #allocation7 [shape = 'u8[262144]{0}', space=vmem, size = 0x40000, scoped, tag = 'input window, operand 2, single buffered']
    #allocation8 [shape = 'u8[262144]{0}', space=vmem, size = 0x40000, scoped, tag = 'input window, operand 3, single buffered']
    #allocation9 [shape = 's32[1]{0}', space=sflag, size = 0x4, scoped, tag = 'scoped memory for tpu_custom_call.1']
    #allocation10 [shape = 'u8[1024]{0}', space=vmem, size = 0x400, scoped, tag = 'output window, operand 0, single buffered']
    %10 = vsyncpa [#allocation3], 0
    %11 = vsyncpa [#allocation6], 0
    %12 = vsyncpa [#allocation9], 0
    %13 = vsyncpa [#allocation4], 0
    // Predicated region
    $region2: #{tpu_custom_call.1} parent=1 // pred_check
      _
    $region3: #{tpu_custom_call.1} parent=1 // pred_check_branch
      %15 = sbr.rel (0) target = $region5
    $region4: #{tpu_custom_call.1} parent=1 // pred_region
      %s17 = ssub.s32 256, 256
      %18 = vsyncadd [#allocation3], %s17
      %s20 = sshll.u32 [#allocation2], 4
      %s21 = int_to_ptr.vmem [resolvable:$true] %s20
      %23 = dma.hbm_to_vmem [thread:$0]  %s0, 256, %s21, [#allocation3]
    $region5: #{tpu_custom_call.1} parent=1 // pred_fallthru
      _
    // Predicated region
    $region6: #{tpu_custom_call.1} parent=1 // pred_check
      _
    $region7: #{tpu_custom_call.1} parent=1 // pred_check_branch
      %25 = sbr.rel (0) target = $region9
    $region8: #{tpu_custom_call.1} parent=1 // pred_region
      %s27 = ssub.s32 256, 256
      %28 = vsyncadd [#allocation6], %s27
      %s30 = sshll.u32 [#allocation5], 4
      %s31 = int_to_ptr.vmem [resolvable:$true] %s30
      %33 = dma.hbm_to_vmem [thread:$0]  %s1, 256, %s31, [#allocation6]
    $region9: #{tpu_custom_call.1} parent=1 // pred_fallthru
      _
    // Predicated region
    $region10: #{tpu_custom_call.1} parent=1 // pred_check
      _
    $region11: #{tpu_custom_call.1} parent=1 // pred_check_branch
      %35 = sbr.rel (0) target = $region13
    $region12: #{tpu_custom_call.1} parent=1 // pred_region
      %s37 = ssub.s32 8192, 8192
      %38 = vsyncadd [#allocation6], %s37
      %s39 = sshll.u32 [#allocation7], 4
      %s40 = int_to_ptr.vmem [resolvable:$true] %s39
      %45 = dma.hbm_to_vmem [thread:$0]  %s2, 8192, %s40, [#allocation6], 64, 64, 4
    $region13: #{tpu_custom_call.1} parent=1 // pred_fallthru
      _
    // Predicated region
    $region14: #{tpu_custom_call.1} parent=1 // pred_check
      _
    $region15: #{tpu_custom_call.1} parent=1 // pred_check_branch
      %47 = sbr.rel (0) target = $region17
    $region16: #{tpu_custom_call.1} parent=1 // pred_region
      %s49 = ssub.s32 8192, 8192
      %50 = vsyncadd [#allocation9], %s49
      %s51 = sshll.u32 [#allocation8], 4
      %s52 = int_to_ptr.vmem [resolvable:$true] %s51
      %57 = dma.hbm_to_vmem [thread:$0]  %s3, 8192, %s52, [#allocation9], 64, 64, 4
    $region17: #{tpu_custom_call.1} parent=1 // pred_fallthru
      _
    // Predicated region
    $region18: #{tpu_custom_call.1} parent=1 // pred_check
      _
    $region19: #{tpu_custom_call.1} parent=1 // pred_check_branch
      %59 = sbr.rel (0) target = $region21
    $region20: #{tpu_custom_call.1} parent=1 // pred_region
      _
    $region21: #{tpu_custom_call.1} parent=1 // pred_fallthru
      _
    // Predicated region
    $region22: #{tpu_custom_call.1} parent=1 // pred_check
      _
    $region23: #{tpu_custom_call.1} parent=1 // pred_check_branch
      %61 = sbr.rel (0) target = $region25
    $region24: #{tpu_custom_call.1} parent=1 // pred_region
      %62 = dma.done [#allocation3], 256
    $region25: #{tpu_custom_call.1} parent=1 // pred_fallthru
      _
    // Predicated region
    $region26: #{tpu_custom_call.1} parent=1 // pred_check
      _
    $region27: #{tpu_custom_call.1} parent=1 // pred_check_branch
      %64 = sbr.rel (0) target = $region29
    $region28: #{tpu_custom_call.1} parent=1 // pred_region
      %65 = dma.done [#allocation6], 256
    $region29: #{tpu_custom_call.1} parent=1 // pred_fallthru
      _
    // Predicated region
    $region30: #{tpu_custom_call.1} parent=1 // pred_check
      _
    $region31: #{tpu_custom_call.1} parent=1 // pred_check_branch
      %67 = sbr.rel (0) target = $region33
    $region32: #{tpu_custom_call.1} parent=1 // pred_region
      %68 = dma.done [#allocation6], 8192
    $region33: #{tpu_custom_call.1} parent=1 // pred_fallthru
      _
    // Predicated region
    $region34: #{tpu_custom_call.1} parent=1 // pred_check
      _
    $region35: #{tpu_custom_call.1} parent=1 // pred_check_branch
      %70 = sbr.rel (0) target = $region37
    $region36: #{tpu_custom_call.1} parent=1 // pred_region
      %71 = dma.done [#allocation9], 8192
    $region37: #{tpu_custom_call.1} parent=1 // pred_fallthru
      _
    %p73 = scmp.eq.s32.totalorder 0, 0
    // Predicated region
    $region38: #{tpu_custom_call.1} parent=1 // pred_check
      %p74 = pneg %p73
    $region39: #{tpu_custom_call.1} parent=1 // pred_check_branch
      %76 = sbr.rel (%p74) target = $region41
    $region40: #{tpu_custom_call.1} parent=1 // pred_region
      %v77 = vld [vmem:[%s4] sm:$0x1]
      %v79 = vlaneseq
      %v80 = vshrl.u32 %v79, 7
      %v81 = vsub.s32 0, %v80
      %v82 = vrot.slane %v77, %v81
      %84 = vst [vmem:[#allocation10] sm:$0x3] %v82
    $region41: #{tpu_custom_call.1} parent=1 // pred_fallthru
      _
    %v85 = vld [vmem:[#allocation10] sm:$0x3]
    %v86 = vld [vmem:[#allocation2] sm:$0xff]
    %v87 = vld [vmem:[#allocation2 + $0x8] sm:$0xff]
    %v90 = vcombine.high %v86, %v86
    %v92 = vunpack.c.l.s4 1983009808
    %v93 = vunpack.c.0.s8 %v92
    %v94 = vlaneseq
    %v95 = vshrl.u32 %v94, 7
    %v96 = vsub.s32 %v93, %v95
    %v97 = vrot.slane %v86, %v96
    %v99 = vunpack.c.l.s4 1983009808
    %v100 = vunpack.c.0.s8 %v99
    %v101 = vlaneseq
    %v102 = vshrl.u32 %v101, 7
    %v103 = vsub.s32 %v100, %v102
    %v104 = vrot.slane %v90, %v103
    %v105 = vcombine.high %v97, %v97
    %v106 = vcombine.high %v104, %v104
    %v107 = vcombine.high %v87, %v87
    %v109 = vunpack.c.l.s4 1983009808
    %v110 = vunpack.c.0.s8 %v109
    %v111 = vlaneseq
    %v112 = vshrl.u32 %v111, 7
    %v113 = vsub.s32 %v110, %v112
    %v114 = vrot.slane %v87, %v113
    %v116 = vunpack.c.l.s4 1983009808
    %v117 = vunpack.c.0.s8 %v116
    %v118 = vlaneseq
    %v119 = vshrl.u32 %v118, 7
    %v120 = vsub.s32 %v117, %v119
    %v121 = vrot.slane %v107, %v120
    %v122 = vcombine.high %v114, %v114
    %v123 = vcombine.high %v121, %v121
    %v132 = vpack.c.bf16 %v97, %v97
    %v133 = vpack.c.bf16 %v105, %v105
    %v134 = vpack.c.bf16 %v104, %v104
    %v135 = vpack.c.bf16 %v106, %v106
    %v136 = vpack.c.bf16 %v114, %v114
    %v137 = vpack.c.bf16 %v122, %v122
    %v138 = vpack.c.bf16 %v121, %v121
    %v139 = vpack.c.bf16 %v123, %v123
    %v140 = vld [vmem:[#allocation7] sm:$0xf]
    %v141 = vld [vmem:[#allocation7 + $0x4] sm:$0xf]
    %v142 = vld [vmem:[#allocation7 + $0x8] sm:$0xf]
    %v143 = vld [vmem:[#allocation7 + $0xc] sm:$0xf]
    %v144 = vld [vmem:[#allocation7 + $0x10] sm:$0xf]
    %v145 = vld [vmem:[#allocation7 + $0x14] sm:$0xf]
    %v146 = vld [vmem:[#allocation7 + $0x18] sm:$0xf]
    %v147 = vld [vmem:[#allocation7 + $0x1c] sm:$0xf]
    %v148 = vld [vmem:[#allocation7 + $0x20] sm:$0xf]
    %v149 = vld [vmem:[#allocation7 + $0x24] sm:$0xf]
    %v150 = vld [vmem:[#allocation7 + $0x28] sm:$0xf]
    %v151 = vld [vmem:[#allocation7 + $0x2c] sm:$0xf]
    %v152 = vld [vmem:[#allocation7 + $0x30] sm:$0xf]
    %v153 = vld [vmem:[#allocation7 + $0x34] sm:$0xf]
    %v154 = vld [vmem:[#allocation7 + $0x38] sm:$0xf]
    %v155 = vld [vmem:[#allocation7 + $0x3c] sm:$0xf]
    %v156 = vld [vmem:[#allocation7 + $0x40] sm:$0xf]
    %v157 = vld [vmem:[#allocation7 + $0x44] sm:$0xf]
    %v158 = vld [vmem:[#allocation7 + $0x48] sm:$0xf]
    %v159 = vld [vmem:[#allocation7 + $0x4c] sm:$0xf]
    %v160 = vld [vmem:[#allocation7 + $0x50] sm:$0xf]
    %v161 = vld [vmem:[#allocation7 + $0x54] sm:$0xf]
    %v162 = vld [vmem:[#allocation7 + $0x58] sm:$0xf]
    %v163 = vld [vmem:[#allocation7 + $0x5c] sm:$0xf]
    %v164 = vld [vmem:[#allocation7 + $0x60] sm:$0xf]
    %v165 = vld [vmem:[#allocation7 + $0x64] sm:$0xf]
    %v166 = vld [vmem:[#allocation7 + $0x68] sm:$0xf]
    %v167 = vld [vmem:[#allocation7 + $0x6c] sm:$0xf]
    %v168 = vld [vmem:[#allocation7 + $0x70] sm:$0xf]
    %v169 = vld [vmem:[#allocation7 + $0x74] sm:$0xf]
    %v170 = vld [vmem:[#allocation7 + $0x78] sm:$0xf]
    %v171 = vld [vmem:[#allocation7 + $0x7c] sm:$0xf]
    %v172 = vld [vmem:[#allocation7 + $0x80] sm:$0xf]
    %v173 = vld [vmem:[#allocation7 + $0x84] sm:$0xf]
    %v174 = vld [vmem:[#allocation7 + $0x88] sm:$0xf]
    %v175 = vld [vmem:[#allocation7 + $0x8c] sm:$0xf]
    %v176 = vld [vmem:[#allocation7 + $0x90] sm:$0xf]
    %v177 = vld [vmem:[#allocation7 + $0x94] sm:$0xf]
    %v178 = vld [vmem:[#allocation7 + $0x98] sm:$0xf]
    %v179 = vld [vmem:[#allocation7 + $0x9c] sm:$0xf]
    %v180 = vld [vmem:[#allocation7 + $0xa0] sm:$0xf]
    %v181 = vld [vmem:[#allocation7 + $0xa4] sm:$0xf]
    %v182 = vld [vmem:[#allocation7 + $0xa8] sm:$0xf]
    %v183 = vld [vmem:[#allocation7 + $0xac] sm:$0xf]
    %v184 = vld [vmem:[#allocation7 + $0xb0] sm:$0xf]
    %v185 = vld [vmem:[#allocation7 + $0xb4] sm:$0xf]
    %v186 = vld [vmem:[#allocation7 + $0xb8] sm:$0xf]
    %v187 = vld [vmem:[#allocation7 + $0xbc] sm:$0xf]
    %v188 = vld [vmem:[#allocation7 + $0xc0] sm:$0xf]
    %v189 = vld [vmem:[#allocation7 + $0xc4] sm:$0xf]
    %v190 = vld [vmem:[#allocation7 + $0xc8] sm:$0xf]
    %v191 = vld [vmem:[#allocation7 + $0xcc] sm:$0xf]
    %v192 = vld [vmem:[#allocation7 + $0xd0] sm:$0xf]
    %v193 = vld [vmem:[#allocation7 + $0xd4] sm:$0xf]
    %v194 = vld [vmem:[#allocation7 + $0xd8] sm:$0xf]
    %v195 = vld [vmem:[#allocation7 + $0xdc] sm:$0xf]
    %v196 = vld [vmem:[#allocation7 + $0xe0] sm:$0xf]
    %v197 = vld [vmem:[#allocation7 + $0xe4] sm:$0xf]
    %v198 = vld [vmem:[#allocation7 + $0xe8] sm:$0xf]
    %v199 = vld [vmem:[#allocation7 + $0xec] sm:$0xf]
    %v200 = vld [vmem:[#allocation7 + $0xf0] sm:$0xf]
    %v201 = vld [vmem:[#allocation7 + $0xf4] sm:$0xf]
    %v202 = vld [vmem:[#allocation7 + $0xf8] sm:$0xf]
    %v203 = vld [vmem:[#allocation7 + $0xfc] sm:$0xf]
    %v204 = vld [vmem:[#allocation7 + $0x100] sm:$0xf]
    %v205 = vld [vmem:[#allocation7 + $0x104] sm:$0xf]
    %v206 = vld [vmem:[#allocation7 + $0x108] sm:$0xf]
    %v207 = vld [vmem:[#allocation7 + $0x10c] sm:$0xf]
    %v208 = vld [vmem:[#allocation7 + $0x110] sm:$0xf]
    %v209 = vld [vmem:[#allocation7 + $0x114] sm:$0xf]
    %v210 = vld [vmem:[#allocation7 + $0x118] sm:$0xf]
    %v211 = vld [vmem:[#allocation7 + $0x11c] sm:$0xf]
    %v212 = vld [vmem:[#allocation7 + $0x120] sm:$0xf]
    %v213 = vld [vmem:[#allocation7 + $0x124] sm:$0xf]
    %v214 = vld [vmem:[#allocation7 + $0x128] sm:$0xf]
    %v215 = vld [vmem:[#allocation7 + $0x12c] sm:$0xf]
    %v216 = vld [vmem:[#allocation7 + $0x130] sm:$0xf]
    %v217 = vld [vmem:[#allocation7 + $0x134] sm:$0xf]
    %v218 = vld [vmem:[#allocation7 + $0x138] sm:$0xf]
    %v219 = vld [vmem:[#allocation7 + $0x13c] sm:$0xf]
    %v220 = vld [vmem:[#allocation7 + $0x140] sm:$0xf]
    %v221 = vld [vmem:[#allocation7 + $0x144] sm:$0xf]
    %v222 = vld [vmem:[#allocation7 + $0x148] sm:$0xf]
    %v223 = vld [vmem:[#allocation7 + $0x14c] sm:$0xf]
    %v224 = vld [vmem:[#allocation7 + $0x150] sm:$0xf]
    %v225 = vld [vmem:[#allocation7 + $0x154] sm:$0xf]
    %v226 = vld [vmem:[#allocation7 + $0x158] sm:$0xf]
    %v227 = vld [vmem:[#allocation7 + $0x15c] sm:$0xf]
    %v228 = vld [vmem:[#allocation7 + $0x160] sm:$0xf]
    %v229 = vld [vmem:[#allocation7 + $0x164] sm:$0xf]
    %v230 = vld [vmem:[#allocation7 + $0x168] sm:$0xf]
    %v231 = vld [vmem:[#allocation7 + $0x16c] sm:$0xf]
    %v232 = vld [vmem:[#allocation7 + $0x170] sm:$0xf]
    %v233 = vld [vmem:[#allocation7 + $0x174] sm:$0xf]
    %v234 = vld [vmem:[#allocation7 + $0x178] sm:$0xf]
    %v235 = vld [vmem:[#allocation7 + $0x17c] sm:$0xf]
    %v236 = vld [vmem:[#allocation7 + $0x180] sm:$0xf]
    %v237 = vld [vmem:[#allocation7 + $0x184] sm:$0xf]
    %v238 = vld [vmem:[#allocation7 + $0x188] sm:$0xf]
    %v239 = vld [vmem:[#allocation7 + $0x18c] sm:$0xf]
    %v240 = vld [vmem:[#allocation7 + $0x190] sm:$0xf]
    %v241 = vld [vmem:[#allocation7 + $0x194] sm:$0xf]
    %v242 = vld [vmem:[#allocation7 + $0x198] sm:$0xf]
    %v243 = vld [vmem:[#allocation7 + $0x19c] sm:$0xf]
    %v244 = vld [vmem:[#allocation7 + $0x1a0] sm:$0xf]
    %v245 = vld [vmem:[#allocation7 + $0x1a4] sm:$0xf]
    %v246 = vld [vmem:[#allocation7 + $0x1a8] sm:$0xf]
    %v247 = vld [vmem:[#allocation7 + $0x1ac] sm:$0xf]
    %v248 = vld [vmem:[#allocation7 + $0x1b0] sm:$0xf]
    %v249 = vld [vmem:[#allocation7 + $0x1b4] sm:$0xf]
    %v250 = vld [vmem:[#allocation7 + $0x1b8] sm:$0xf]
    %v251 = vld [vmem:[#allocation7 + $0x1bc] sm:$0xf]
    %v252 = vld [vmem:[#allocation7 + $0x1c0] sm:$0xf]
    %v253 = vld [vmem:[#allocation7 + $0x1c4] sm:$0xf]
    %v254 = vld [vmem:[#allocation7 + $0x1c8] sm:$0xf]
    %v255 = vld [vmem:[#allocation7 + $0x1cc] sm:$0xf]
    %v256 = vld [vmem:[#allocation7 + $0x1d0] sm:$0xf]
    %v257 = vld [vmem:[#allocation7 + $0x1d4] sm:$0xf]
    %v258 = vld [vmem:[#allocation7 + $0x1d8] sm:$0xf]
    %v259 = vld [vmem:[#allocation7 + $0x1dc] sm:$0xf]
    %v260 = vld [vmem:[#allocation7 + $0x1e0] sm:$0xf]
    %v261 = vld [vmem:[#allocation7 + $0x1e4] sm:$0xf]
    %v262 = vld [vmem:[#allocation7 + $0x1e8] sm:$0xf]
    %v263 = vld [vmem:[#allocation7 + $0x1ec] sm:$0xf]
    %v264 = vld [vmem:[#allocation7 + $0x1f0] sm:$0xf]
    %v265 = vld [vmem:[#allocation7 + $0x1f4] sm:$0xf]
    %v266 = vld [vmem:[#allocation7 + $0x1f8] sm:$0xf]
    %v267 = vld [vmem:[#allocation7 + $0x1fc] sm:$0xf]
    %v268 = vld [vmem:[#allocation5] sm:$0xff]
    %v269 = vld [vmem:[#allocation5 + $0x8] sm:$0xff]
    %v272 = vcombine.high %v268, %v268
    %v274 = vunpack.c.l.s4 1983009808
    %v275 = vunpack.c.0.s8 %v274
    %v276 = vlaneseq
    %v277 = vshrl.u32 %v276, 7
    %v278 = vsub.s32 %v275, %v277
    %v279 = vrot.slane %v268, %v278
    %v281 = vunpack.c.l.s4 1983009808
    %v282 = vunpack.c.0.s8 %v281
    %v283 = vlaneseq
    %v284 = vshrl.u32 %v283, 7
    %v285 = vsub.s32 %v282, %v284
    %v286 = vrot.slane %v272, %v285
    %v287 = vcombine.high %v279, %v279
    %v288 = vcombine.high %v286, %v286
    %v289 = vcombine.high %v269, %v269
    %v291 = vunpack.c.l.s4 1983009808
    %v292 = vunpack.c.0.s8 %v291
    %v293 = vlaneseq
    %v294 = vshrl.u32 %v293, 7
    %v295 = vsub.s32 %v292, %v294
    %v296 = vrot.slane %v269, %v295
    %v298 = vunpack.c.l.s4 1983009808
    %v299 = vunpack.c.0.s8 %v298
    %v300 = vlaneseq
    %v301 = vshrl.u32 %v300, 7
    %v302 = vsub.s32 %v299, %v301
    %v303 = vrot.slane %v289, %v302
    %v304 = vcombine.high %v296, %v296
    %v305 = vcombine.high %v303, %v303
    %v314 = vpack.c.bf16 %v279, %v279
    %v315 = vpack.c.bf16 %v287, %v287
    %v316 = vpack.c.bf16 %v286, %v286
    %v317 = vpack.c.bf16 %v288, %v288
    %v318 = vpack.c.bf16 %v296, %v296
    %v319 = vpack.c.bf16 %v304, %v304
    %v320 = vpack.c.bf16 %v303, %v303
    %v321 = vpack.c.bf16 %v305, %v305
    %v322 = vld [vmem:[#allocation8] sm:$0xf]
    %v323 = vld [vmem:[#allocation8 + $0x4] sm:$0xf]
    %v324 = vld [vmem:[#allocation8 + $0x8] sm:$0xf]
    %v325 = vld [vmem:[#allocation8 + $0xc] sm:$0xf]
    %v326 = vld [vmem:[#allocation8 + $0x10] sm:$0xf]
    %v327 = vld [vmem:[#allocation8 + $0x14] sm:$0xf]
    %v328 = vld [vmem:[#allocation8 + $0x18] sm:$0xf]
    %v329 = vld [vmem:[#allocation8 + $0x1c] sm:$0xf]
    %v330 = vld [vmem:[#allocation8 + $0x20] sm:$0xf]
    %v331 = vld [vmem:[#allocation8 + $0x24] sm:$0xf]
    %v332 = vld [vmem:[#allocation8 + $0x28] sm:$0xf]
    %v333 = vld [vmem:[#allocation8 + $0x2c] sm:$0xf]
    %v334 = vld [vmem:[#allocation8 + $0x30] sm:$0xf]
    %v335 = vld [vmem:[#allocation8 + $0x34] sm:$0xf]
    %v336 = vld [vmem:[#allocation8 + $0x38] sm:$0xf]
    %v337 = vld [vmem:[#allocation8 + $0x3c] sm:$0xf]
    %v338 = vld [vmem:[#allocation8 + $0x40] sm:$0xf]
    %v339 = vld [vmem:[#allocation8 + $0x44] sm:$0xf]
    %v340 = vld [vmem:[#allocation8 + $0x48] sm:$0xf]
    %v341 = vld [vmem:[#allocation8 + $0x4c] sm:$0xf]
    %v342 = vld [vmem:[#allocation8 + $0x50] sm:$0xf]
    %v343 = vld [vmem:[#allocation8 + $0x54] sm:$0xf]
    %v344 = vld [vmem:[#allocation8 + $0x58] sm:$0xf]
    %v345 = vld [vmem:[#allocation8 + $0x5c] sm:$0xf]
    %v346 = vld [vmem:[#allocation8 + $0x60] sm:$0xf]
    %v347 = vld [vmem:[#allocation8 + $0x64] sm:$0xf]
    %v348 = vld [vmem:[#allocation8 + $0x68] sm:$0xf]
    %v349 = vld [vmem:[#allocation8 + $0x6c] sm:$0xf]
    %v350 = vld [vmem:[#allocation8 + $0x70] sm:$0xf]
    %v351 = vld [vmem:[#allocation8 + $0x74] sm:$0xf]
    %v352 = vld [vmem:[#allocation8 + $0x78] sm:$0xf]
    %v353 = vld [vmem:[#allocation8 + $0x7c] sm:$0xf]
    %v354 = vld [vmem:[#allocation8 + $0x80] sm:$0xf]
    %v355 = vld [vmem:[#allocation8 + $0x84] sm:$0xf]
    %v356 = vld [vmem:[#allocation8 + $0x88] sm:$0xf]
    %v357 = vld [vmem:[#allocation8 + $0x8c] sm:$0xf]
    %v358 = vld [vmem:[#allocation8 + $0x90] sm:$0xf]
    %v359 = vld [vmem:[#allocation8 + $0x94] sm:$0xf]
    %v360 = vld [vmem:[#allocation8 + $0x98] sm:$0xf]
    %v361 = vld [vmem:[#allocation8 + $0x9c] sm:$0xf]
    %v362 = vld [vmem:[#allocation8 + $0xa0] sm:$0xf]
    %v363 = vld [vmem:[#allocation8 + $0xa4] sm:$0xf]
    %v364 = vld [vmem:[#allocation8 + $0xa8] sm:$0xf]
    %v365 = vld [vmem:[#allocation8 + $0xac] sm:$0xf]
    %v366 = vld [vmem:[#allocation8 + $0xb0] sm:$0xf]
    %v367 = vld [vmem:[#allocation8 + $0xb4] sm:$0xf]
    %v368 = vld [vmem:[#allocation8 + $0xb8] sm:$0xf]
    %v369 = vld [vmem:[#allocation8 + $0xbc] sm:$0xf]
    %v370 = vld [vmem:[#allocation8 + $0xc0] sm:$0xf]
    %v371 = vld [vmem:[#allocation8 + $0xc4] sm:$0xf]
    %v372 = vld [vmem:[#allocation8 + $0xc8] sm:$0xf]
    %v373 = vld [vmem:[#allocation8 + $0xcc] sm:$0xf]
    %v374 = vld [vmem:[#allocation8 + $0xd0] sm:$0xf]
    %v375 = vld [vmem:[#allocation8 + $0xd4] sm:$0xf]
    %v376 = vld [vmem:[#allocation8 + $0xd8] sm:$0xf]
    %v377 = vld [vmem:[#allocation8 + $0xdc] sm:$0xf]
    %v378 = vld [vmem:[#allocation8 + $0xe0] sm:$0xf]
    %v379 = vld [vmem:[#allocation8 + $0xe4] sm:$0xf]
    %v380 = vld [vmem:[#allocation8 + $0xe8] sm:$0xf]
    %v381 = vld [vmem:[#allocation8 + $0xec] sm:$0xf]
    %v382 = vld [vmem:[#allocation8 + $0xf0] sm:$0xf]
    %v383 = vld [vmem:[#allocation8 + $0xf4] sm:$0xf]
    %v384 = vld [vmem:[#allocation8 + $0xf8] sm:$0xf]
    %v385 = vld [vmem:[#allocation8 + $0xfc] sm:$0xf]
    %v386 = vld [vmem:[#allocation8 + $0x100] sm:$0xf]
    %v387 = vld [vmem:[#allocation8 + $0x104] sm:$0xf]
    %v388 = vld [vmem:[#allocation8 + $0x108] sm:$0xf]
    %v389 = vld [vmem:[#allocation8 + $0x10c] sm:$0xf]
    %v390 = vld [vmem:[#allocation8 + $0x110] sm:$0xf]
    %v391 = vld [vmem:[#allocation8 + $0x114] sm:$0xf]
    %v392 = vld [vmem:[#allocation8 + $0x118] sm:$0xf]
    %v393 = vld [vmem:[#allocation8 + $0x11c] sm:$0xf]
    %v394 = vld [vmem:[#allocation8 + $0x120] sm:$0xf]
    %v395 = vld [vmem:[#allocation8 + $0x124] sm:$0xf]
    %v396 = vld [vmem:[#allocation8 + $0x128] sm:$0xf]
    %v397 = vld [vmem:[#allocation8 + $0x12c] sm:$0xf]
    %v398 = vld [vmem:[#allocation8 + $0x130] sm:$0xf]
    %v399 = vld [vmem:[#allocation8 + $0x134] sm:$0xf]
    %v400 = vld [vmem:[#allocation8 + $0x138] sm:$0xf]
    %v401 = vld [vmem:[#allocation8 + $0x13c] sm:$0xf]
    %v402 = vld [vmem:[#allocation8 + $0x140] sm:$0xf]
    %v403 = vld [vmem:[#allocation8 + $0x144] sm:$0xf]
    %v404 = vld [vmem:[#allocation8 + $0x148] sm:$0xf]
    %v405 = vld [vmem:[#allocation8 + $0x14c] sm:$0xf]
    %v406 = vld [vmem:[#allocation8 + $0x150] sm:$0xf]
    %v407 = vld [vmem:[#allocation8 + $0x154] sm:$0xf]
    %v408 = vld [vmem:[#allocation8 + $0x158] sm:$0xf]
    %v409 = vld [vmem:[#allocation8 + $0x15c] sm:$0xf]
    %v410 = vld [vmem:[#allocation8 + $0x160] sm:$0xf]
    %v411 = vld [vmem:[#allocation8 + $0x164] sm:$0xf]
    %v412 = vld [vmem:[#allocation8 + $0x168] sm:$0xf]
    %v413 = vld [vmem:[#allocation8 + $0x16c] sm:$0xf]
    %v414 = vld [vmem:[#allocation8 + $0x170] sm:$0xf]
    %v415 = vld [vmem:[#allocation8 + $0x174] sm:$0xf]
    %v416 = vld [vmem:[#allocation8 + $0x178] sm:$0xf]
    %v417 = vld [vmem:[#allocation8 + $0x17c] sm:$0xf]
    %v418 = vld [vmem:[#allocation8 + $0x180] sm:$0xf]
    %v419 = vld [vmem:[#allocation8 + $0x184] sm:$0xf]
    %v420 = vld [vmem:[#allocation8 + $0x188] sm:$0xf]
    %v421 = vld [vmem:[#allocation8 + $0x18c] sm:$0xf]
    %v422 = vld [vmem:[#allocation8 + $0x190] sm:$0xf]
    %v423 = vld [vmem:[#allocation8 + $0x194] sm:$0xf]
    %v424 = vld [vmem:[#allocation8 + $0x198] sm:$0xf]
    %v425 = vld [vmem:[#allocation8 + $0x19c] sm:$0xf]
    %v426 = vld [vmem:[#allocation8 + $0x1a0] sm:$0xf]
    %v427 = vld [vmem:[#allocation8 + $0x1a4] sm:$0xf]
    %v428 = vld [vmem:[#allocation8 + $0x1a8] sm:$0xf]
    %v429 = vld [vmem:[#allocation8 + $0x1ac] sm:$0xf]
    %v430 = vld [vmem:[#allocation8 + $0x1b0] sm:$0xf]
    %v431 = vld [vmem:[#allocation8 + $0x1b4] sm:$0xf]
    %v432 = vld [vmem:[#allocation8 + $0x1b8] sm:$0xf]
    %v433 = vld [vmem:[#allocation8 + $0x1bc] sm:$0xf]
    %v434 = vld [vmem:[#allocation8 + $0x1c0] sm:$0xf]
    %v435 = vld [vmem:[#allocation8 + $0x1c4] sm:$0xf]
    %v436 = vld [vmem:[#allocation8 + $0x1c8] sm:$0xf]
    %v437 = vld [vmem:[#allocation8 + $0x1cc] sm:$0xf]
    %v438 = vld [vmem:[#allocation8 + $0x1d0] sm:$0xf]
    %v439 = vld [vmem:[#allocation8 + $0x1d4] sm:$0xf]
    %v440 = vld [vmem:[#allocation8 + $0x1d8] sm:$0xf]
    %v441 = vld [vmem:[#allocation8 + $0x1dc] sm:$0xf]
    %v442 = vld [vmem:[#allocation8 + $0x1e0] sm:$0xf]
    %v443 = vld [vmem:[#allocation8 + $0x1e4] sm:$0xf]
    %v444 = vld [vmem:[#allocation8 + $0x1e8] sm:$0xf]
    %v445 = vld [vmem:[#allocation8 + $0x1ec] sm:$0xf]
    %v446 = vld [vmem:[#allocation8 + $0x1f0] sm:$0xf]
    %v447 = vld [vmem:[#allocation8 + $0x1f4] sm:$0xf]
    %v448 = vld [vmem:[#allocation8 + $0x1f8] sm:$0xf]
    %v449 = vld [vmem:[#allocation8 + $0x1fc] sm:$0xf]
    %v578 = vunpack.c.l.b16 %v322
    %v579 = vunpack.c.l.b16 %v323
    %v580 = vunpack.c.l.b16 %v324
    %v581 = vunpack.c.l.b16 %v325
    %v582 = vunpack.c.l.b16 %v326
    %v583 = vunpack.c.l.b16 %v327
    %v584 = vunpack.c.l.b16 %v328
    %v585 = vunpack.c.l.b16 %v329
    %v586 = vunpack.c.l.b16 %v330
    %v587 = vunpack.c.l.b16 %v331
    %v588 = vunpack.c.l.b16 %v332
    %v589 = vunpack.c.l.b16 %v333
    %v590 = vunpack.c.l.b16 %v334
    %v591 = vunpack.c.l.b16 %v335
    %v592 = vunpack.c.l.b16 %v336
    %v593 = vunpack.c.l.b16 %v337
    %v594 = vunpack.c.l.b16 %v338
    %v595 = vunpack.c.l.b16 %v339
    %v596 = vunpack.c.l.b16 %v340
    %v597 = vunpack.c.l.b16 %v341
    %v598 = vunpack.c.l.b16 %v342
    %v599 = vunpack.c.l.b16 %v343
    %v600 = vunpack.c.l.b16 %v344
    %v601 = vunpack.c.l.b16 %v345
    %v602 = vunpack.c.l.b16 %v346
    %v603 = vunpack.c.l.b16 %v347
    %v604 = vunpack.c.l.b16 %v348
    %v605 = vunpack.c.l.b16 %v349
    %v606 = vunpack.c.l.b16 %v350
    %v607 = vunpack.c.l.b16 %v351
    %v608 = vunpack.c.l.b16 %v352
    %v609 = vunpack.c.l.b16 %v353
    %v610 = vunpack.c.l.b16 %v354
    %v611 = vunpack.c.l.b16 %v355
    %v612 = vunpack.c.l.b16 %v356
    %v613 = vunpack.c.l.b16 %v357
    %v614 = vunpack.c.l.b16 %v358
    %v615 = vunpack.c.l.b16 %v359
    %v616 = vunpack.c.l.b16 %v360
    %v617 = vunpack.c.l.b16 %v361
    %v618 = vunpack.c.l.b16 %v362
    %v619 = vunpack.c.l.b16 %v363
    %v620 = vunpack.c.l.b16 %v364
    %v621 = vunpack.c.l.b16 %v365
    %v622 = vunpack.c.l.b16 %v366
    %v623 = vunpack.c.l.b16 %v367
    %v624 = vunpack.c.l.b16 %v368
    %v625 = vunpack.c.l.b16 %v369
    %v626 = vunpack.c.l.b16 %v370
    %v627 = vunpack.c.l.b16 %v371
    %v628 = vunpack.c.l.b16 %v372
    %v629 = vunpack.c.l.b16 %v373
    %v630 = vunpack.c.l.b16 %v374
    %v631 = vunpack.c.l.b16 %v375
    %v632 = vunpack.c.l.b16 %v376
    %v633 = vunpack.c.l.b16 %v377
    %v634 = vunpack.c.l.b16 %v378
    %v635 = vunpack.c.l.b16 %v379
    %v636 = vunpack.c.l.b16 %v380
    %v637 = vunpack.c.l.b16 %v381
    %v638 = vunpack.c.l.b16 %v382
    %v639 = vunpack.c.l.b16 %v383
    %v640 = vunpack.c.l.b16 %v384
    %v641 = vunpack.c.l.b16 %v385
    %v642 = vunpack.c.l.b16 %v386
    %v643 = vunpack.c.l.b16 %v387
    %v644 = vunpack.c.l.b16 %v388
    %v645 = vunpack.c.l.b16 %v389
    %v646 = vunpack.c.l.b16 %v390
    %v647 = vunpack.c.l.b16 %v391
    %v648 = vunpack.c.l.b16 %v392
    %v649 = vunpack.c.l.b16 %v393
    %v650 = vunpack.c.l.b16 %v394
    %v651 = vunpack.c.l.b16 %v395
    %v652 = vunpack.c.l.b16 %v396
    %v653 = vunpack.c.l.b16 %v397
    %v654 = vunpack.c.l.b16 %v398
    %v655 = vunpack.c.l.b16 %v399
    %v656 = vunpack.c.l.b16 %v400
    %v657 = vunpack.c.l.b16 %v401
    %v658 = vunpack.c.l.b16 %v402
    %v659 = vunpack.c.l.b16 %v403
    %v660 = vunpack.c.l.b16 %v404
    %v661 = vunpack.c.l.b16 %v405
    %v662 = vunpack.c.l.b16 %v406
    %v663 = vunpack.c.l.b16 %v407
    %v664 = vunpack.c.l.b16 %v408
    %v665 = vunpack.c.l.b16 %v409
    %v666 = vunpack.c.l.b16 %v410
    %v667 = vunpack.c.l.b16 %v411
    %v668 = vunpack.c.l.b16 %v412
    %v669 = vunpack.c.l.b16 %v413
    %v670 = vunpack.c.l.b16 %v414
    %v671 = vunpack.c.l.b16 %v415
    %v672 = vunpack.c.l.b16 %v416
    %v673 = vunpack.c.l.b16 %v417
    %v674 = vunpack.c.l.b16 %v418
    %v675 = vunpack.c.l.b16 %v419
    %v676 = vunpack.c.l.b16 %v420
    %v677 = vunpack.c.l.b16 %v421
    %v678 = vunpack.c.l.b16 %v422
    %v679 = vunpack.c.l.b16 %v423
    %v680 = vunpack.c.l.b16 %v424
    %v681 = vunpack.c.l.b16 %v425
    %v682 = vunpack.c.l.b16 %v426
    %v683 = vunpack.c.l.b16 %v427
    %v684 = vunpack.c.l.b16 %v428
    %v685 = vunpack.c.l.b16 %v429
    %v686 = vunpack.c.l.b16 %v430
    %v687 = vunpack.c.l.b16 %v431
    %v688 = vunpack.c.l.b16 %v432
    %v689 = vunpack.c.l.b16 %v433
    %v690 = vunpack.c.l.b16 %v434
    %v691 = vunpack.c.l.b16 %v435
    %v692 = vunpack.c.l.b16 %v436
    %v693 = vunpack.c.l.b16 %v437
    %v694 = vunpack.c.l.b16 %v438
    %v695 = vunpack.c.l.b16 %v439
    %v696 = vunpack.c.l.b16 %v440
    %v697 = vunpack.c.l.b16 %v441
    %v698 = vunpack.c.l.b16 %v442
    %v699 = vunpack.c.l.b16 %v443
    %v700 = vunpack.c.l.b16 %v444
    %v701 = vunpack.c.l.b16 %v445
    %v702 = vunpack.c.l.b16 %v446
    %v703 = vunpack.c.l.b16 %v447
    %v704 = vunpack.c.l.b16 %v448
    %v705 = vunpack.c.l.b16 %v449
    %v706 = vpack.c.b16 %v579, %v578
    %v707 = vpack.c.b16 %v581, %v580
    %v708 = vpack.c.b16 %v583, %v582
    %v709 = vpack.c.b16 %v585, %v584
    %v710 = vpack.c.b16 %v587, %v586
    %v711 = vpack.c.b16 %v589, %v588
    %v712 = vpack.c.b16 %v591, %v590
    %v713 = vpack.c.b16 %v593, %v592
    %v714 = vpack.c.b16 %v595, %v594
    %v715 = vpack.c.b16 %v597, %v596
    %v716 = vpack.c.b16 %v599, %v598
    %v717 = vpack.c.b16 %v601, %v600
    %v718 = vpack.c.b16 %v603, %v602
    %v719 = vpack.c.b16 %v605, %v604
    %v720 = vpack.c.b16 %v607, %v606
    %v721 = vpack.c.b16 %v609, %v608
    %v722 = vpack.c.b16 %v611, %v610
    %v723 = vpack.c.b16 %v613, %v612
    %v724 = vpack.c.b16 %v615, %v614
    %v725 = vpack.c.b16 %v617, %v616
    %v726 = vpack.c.b16 %v619, %v618
    %v727 = vpack.c.b16 %v621, %v620
    %v728 = vpack.c.b16 %v623, %v622
    %v729 = vpack.c.b16 %v625, %v624
    %v730 = vpack.c.b16 %v627, %v626
    %v731 = vpack.c.b16 %v629, %v628
    %v732 = vpack.c.b16 %v631, %v630
    %v733 = vpack.c.b16 %v633, %v632
    %v734 = vpack.c.b16 %v635, %v634
    %v735 = vpack.c.b16 %v637, %v636
    %v736 = vpack.c.b16 %v639, %v638
    %v737 = vpack.c.b16 %v641, %v640
    %v738 = vpack.c.b16 %v643, %v642
    %v739 = vpack.c.b16 %v645, %v644
    %v740 = vpack.c.b16 %v647, %v646
    %v741 = vpack.c.b16 %v649, %v648
    %v742 = vpack.c.b16 %v651, %v650
    %v743 = vpack.c.b16 %v653, %v652
    %v744 = vpack.c.b16 %v655, %v654
    %v745 = vpack.c.b16 %v657, %v656
    %v746 = vpack.c.b16 %v659, %v658
    %v747 = vpack.c.b16 %v661, %v660
    %v748 = vpack.c.b16 %v663, %v662
    %v749 = vpack.c.b16 %v665, %v664
    %v750 = vpack.c.b16 %v667, %v666
    %v751 = vpack.c.b16 %v669, %v668
    %v752 = vpack.c.b16 %v671, %v670
    %v753 = vpack.c.b16 %v673, %v672
    %v754 = vpack.c.b16 %v675, %v674
    %v755 = vpack.c.b16 %v677, %v676
    %v756 = vpack.c.b16 %v679, %v678
    %v757 = vpack.c.b16 %v681, %v680
    %v758 = vpack.c.b16 %v683, %v682
    %v759 = vpack.c.b16 %v685, %v684
    %v760 = vpack.c.b16 %v687, %v686
    %v761 = vpack.c.b16 %v689, %v688
    %v762 = vpack.c.b16 %v691, %v690
    %v763 = vpack.c.b16 %v693, %v692
    %v764 = vpack.c.b16 %v695, %v694
    %v765 = vpack.c.b16 %v697, %v696
    %v766 = vpack.c.b16 %v699, %v698
    %v767 = vpack.c.b16 %v701, %v700
    %v768 = vpack.c.b16 %v703, %v702
    %v769 = vpack.c.b16 %v705, %v704
    %834 = vmatprep.subr.bf16.mxu0 0
    %835 = vmatpush1.bf16.msra.mxu0 %v713
    %836 = vmatprep.subr.bf16.mxu0 0
    %837 = vmatpush1.bf16.msra.mxu0 %v712
    %838 = vmatprep.subr.bf16.mxu0 0
    %839 = vmatpush1.bf16.msra.mxu0 %v711
    %840 = vmatprep.subr.bf16.mxu0 0
    %841 = vmatpush1.bf16.msra.mxu0 %v710
    %842 = vmatprep.subr.bf16.mxu0 0
    %843 = vmatpush1.bf16.msra.mxu0 %v709
    %844 = vmatprep.subr.bf16.mxu0 0
    %845 = vmatpush1.bf16.msra.mxu0 %v708
    %846 = vmatprep.subr.bf16.mxu0 0
    %847 = vmatpush1.bf16.msra.mxu0 %v707
    %848 = vmatprep.subr.bf16.mxu0 0
    %849 = vmatpush1.bf16.msra.mxu0 %v706
    %850 = vmatprep.subr.bf16.mxu0 0
    %851 = vmatpush2.bf16.msra.mxu0 %v721
    %852 = vmatprep.subr.bf16.mxu0 0
    %853 = vmatpush2.bf16.msra.mxu0 %v720
    %854 = vmatprep.subr.bf16.mxu0 0
    %855 = vmatpush2.bf16.msra.mxu0 %v719
    %856 = vmatprep.subr.bf16.mxu0 0
    %857 = vmatpush2.bf16.msra.mxu0 %v718
    %858 = vmatprep.subr.bf16.mxu0 0
    %859 = vmatpush2.bf16.msra.mxu0 %v717
    %860 = vmatprep.subr.bf16.mxu0 0
    %861 = vmatpush2.bf16.msra.mxu0 %v716
    %862 = vmatprep.subr.bf16.mxu0 0
    %863 = vmatpush2.bf16.msra.mxu0 %v715
    %864 = vmatprep.subr.bf16.mxu0 0
    %865 = vmatpush2.bf16.msra.mxu0 %v714
    %866 = vmatprep.mubr.bf16.mxu0 %v315
    %867 = vmatmul.mubr.bf16.gmra.mxu0 %v314
    %v868 = vpop.f32.mrf.mxu0
    %v869 = vadd.f32 0.0, %v868
    %v870 = vpop.f32.mrf.mxu0
    %v871 = vpop.f32.mrf.mxu0
    %v872 = vpop.f32.mrf.mxu0
    %873 = vdwg.mxu0
    %874 = vmatprep.subr.bf16.mxu0 0
    %875 = vmatpush1.bf16.msra.mxu0 %v729
    %876 = vmatprep.subr.bf16.mxu0 0
    %877 = vmatpush1.bf16.msra.mxu0 %v728
    %878 = vmatprep.subr.bf16.mxu0 0
    %879 = vmatpush1.bf16.msra.mxu0 %v727
    %880 = vmatprep.subr.bf16.mxu0 0
    %881 = vmatpush1.bf16.msra.mxu0 %v726
    %882 = vmatprep.subr.bf16.mxu0 0
    %883 = vmatpush1.bf16.msra.mxu0 %v725
    %884 = vmatprep.subr.bf16.mxu0 0
    %885 = vmatpush1.bf16.msra.mxu0 %v724
    %886 = vmatprep.subr.bf16.mxu0 0
    %887 = vmatpush1.bf16.msra.mxu0 %v723
    %888 = vmatprep.subr.bf16.mxu0 0
    %889 = vmatpush1.bf16.msra.mxu0 %v722
    %890 = vmatprep.subr.bf16.mxu0 0
    %891 = vmatpush2.bf16.msra.mxu0 %v737
    %892 = vmatprep.subr.bf16.mxu0 0
    %893 = vmatpush2.bf16.msra.mxu0 %v736
    %894 = vmatprep.subr.bf16.mxu0 0
    %895 = vmatpush2.bf16.msra.mxu0 %v735
    %896 = vmatprep.subr.bf16.mxu0 0
    %897 = vmatpush2.bf16.msra.mxu0 %v734
    %898 = vmatprep.subr.bf16.mxu0 0
    %899 = vmatpush2.bf16.msra.mxu0 %v733
    %900 = vmatprep.subr.bf16.mxu0 0
    %901 = vmatpush2.bf16.msra.mxu0 %v732
    %902 = vmatprep.subr.bf16.mxu0 0
    %903 = vmatpush2.bf16.msra.mxu0 %v731
    %904 = vmatprep.subr.bf16.mxu0 0
    %905 = vmatpush2.bf16.msra.mxu0 %v730
    %906 = vmatprep.mubr.bf16.mxu0 %v317
    %907 = vmatmul.mubr.bf16.gmra.mxu0 %v316
    %v908 = vpop.f32.mrf.mxu0
    %v909 = vadd.f32 %v869, %v908
    %v910 = vpop.f32.mrf.mxu0
    %v911 = vpop.f32.mrf.mxu0
    %v912 = vpop.f32.mrf.mxu0
    %913 = vdwg.mxu0
    %914 = vmatprep.subr.bf16.mxu0 0
    %915 = vmatpush1.bf16.msra.mxu0 %v745
    %916 = vmatprep.subr.bf16.mxu0 0
    %917 = vmatpush1.bf16.msra.mxu0 %v744
    %918 = vmatprep.subr.bf16.mxu0 0
    %919 = vmatpush1.bf16.msra.mxu0 %v743
    %920 = vmatprep.subr.bf16.mxu0 0
    %921 = vmatpush1.bf16.msra.mxu0 %v742
    %922 = vmatprep.subr.bf16.mxu0 0
    %923 = vmatpush1.bf16.msra.mxu0 %v741
    %924 = vmatprep.subr.bf16.mxu0 0
    %925 = vmatpush1.bf16.msra.mxu0 %v740
    %926 = vmatprep.subr.bf16.mxu0 0
    %927 = vmatpush1.bf16.msra.mxu0 %v739
    %928 = vmatprep.subr.bf16.mxu0 0
    %929 = vmatpush1.bf16.msra.mxu0 %v738
    %930 = vmatprep.subr.bf16.mxu0 0
    %931 = vmatpush2.bf16.msra.mxu0 %v753
    %932 = vmatprep.subr.bf16.mxu0 0
    %933 = vmatpush2.bf16.msra.mxu0 %v752
    %934 = vmatprep.subr.bf16.mxu0 0
    %935 = vmatpush2.bf16.msra.mxu0 %v751
    %936 = vmatprep.subr.bf16.mxu0 0
    %937 = vmatpush2.bf16.msra.mxu0 %v750
    %938 = vmatprep.subr.bf16.mxu0 0
    %939 = vmatpush2.bf16.msra.mxu0 %v749
    %940 = vmatprep.subr.bf16.mxu0 0
    %941 = vmatpush2.bf16.msra.mxu0 %v748
    %942 = vmatprep.subr.bf16.mxu0 0
    %943 = vmatpush2.bf16.msra.mxu0 %v747
    %944 = vmatprep.subr.bf16.mxu0 0
    %945 = vmatpush2.bf16.msra.mxu0 %v746
    %946 = vmatprep.mubr.bf16.mxu0 %v319
    %947 = vmatmul.mubr.bf16.gmra.mxu0 %v318
    %v948 = vpop.f32.mrf.mxu0
    %v949 = vadd.f32 %v909, %v948
    %v950 = vpop.f32.mrf.mxu0
    %v951 = vpop.f32.mrf.mxu0
    %v952 = vpop.f32.mrf.mxu0
    %953 = vdwg.mxu0
    %954 = vmatprep.subr.bf16.mxu0 0
    %955 = vmatpush1.bf16.msra.mxu0 %v761
    %956 = vmatprep.subr.bf16.mxu0 0
    %957 = vmatpush1.bf16.msra.mxu0 %v760
    %958 = vmatprep.subr.bf16.mxu0 0
    %959 = vmatpush1.bf16.msra.mxu0 %v759
    %960 = vmatprep.subr.bf16.mxu0 0
    %961 = vmatpush1.bf16.msra.mxu0 %v758
    %962 = vmatprep.subr.bf16.mxu0 0
    %963 = vmatpush1.bf16.msra.mxu0 %v757
    %964 = vmatprep.subr.bf16.mxu0 0
    %965 = vmatpush1.bf16.msra.mxu0 %v756
    %966 = vmatprep.subr.bf16.mxu0 0
    %967 = vmatpush1.bf16.msra.mxu0 %v755
    %968 = vmatprep.subr.bf16.mxu0 0
    %969 = vmatpush1.bf16.msra.mxu0 %v754
    %970 = vmatprep.subr.bf16.mxu0 0
    %971 = vmatpush2.bf16.msra.mxu0 %v769
    %972 = vmatprep.subr.bf16.mxu0 0
    %973 = vmatpush2.bf16.msra.mxu0 %v768
    %974 = vmatprep.subr.bf16.mxu0 0
    %975 = vmatpush2.bf16.msra.mxu0 %v767
    %976 = vmatprep.subr.bf16.mxu0 0
    %977 = vmatpush2.bf16.msra.mxu0 %v766
    %978 = vmatprep.subr.bf16.mxu0 0
    %979 = vmatpush2.bf16.msra.mxu0 %v765
    %980 = vmatprep.subr.bf16.mxu0 0
    %981 = vmatpush2.bf16.msra.mxu0 %v764
    %982 = vmatprep.subr.bf16.mxu0 0
    %983 = vmatpush2.bf16.msra.mxu0 %v763
    %984 = vmatprep.subr.bf16.mxu0 0
    %985 = vmatpush2.bf16.msra.mxu0 %v762
    %986 = vmatprep.mubr.bf16.mxu0 %v321
    %987 = vmatmul.mubr.bf16.gmra.mxu0 %v320
    %v988 = vpop.f32.mrf.mxu0
    %v989 = vadd.f32 %v949, %v988
    %v990 = vpop.f32.mrf.mxu0
    %v991 = vpop.f32.mrf.mxu0
    %v992 = vpop.f32.mrf.mxu0
    %993 = vdwg.mxu0
    %v1122 = vunpack.c.l.b16 %v140
    %v1123 = vunpack.c.l.b16 %v141
    %v1124 = vunpack.c.l.b16 %v142
    %v1125 = vunpack.c.l.b16 %v143
    %v1126 = vunpack.c.l.b16 %v144
    %v1127 = vunpack.c.l.b16 %v145
    %v1128 = vunpack.c.l.b16 %v146
    %v1129 = vunpack.c.l.b16 %v147
    %v1130 = vunpack.c.l.b16 %v148
    %v1131 = vunpack.c.l.b16 %v149
    %v1132 = vunpack.c.l.b16 %v150
    %v1133 = vunpack.c.l.b16 %v151
    %v1134 = vunpack.c.l.b16 %v152
    %v1135 = vunpack.c.l.b16 %v153
    %v1136 = vunpack.c.l.b16 %v154
    %v1137 = vunpack.c.l.b16 %v155
    %v1138 = vunpack.c.l.b16 %v156
    %v1139 = vunpack.c.l.b16 %v157
    %v1140 = vunpack.c.l.b16 %v158
    %v1141 = vunpack.c.l.b16 %v159
    %v1142 = vunpack.c.l.b16 %v160
    %v1143 = vunpack.c.l.b16 %v161
    %v1144 = vunpack.c.l.b16 %v162
    %v1145 = vunpack.c.l.b16 %v163
    %v1146 = vunpack.c.l.b16 %v164
    %v1147 = vunpack.c.l.b16 %v165
    %v1148 = vunpack.c.l.b16 %v166
    %v1149 = vunpack.c.l.b16 %v167
    %v1150 = vunpack.c.l.b16 %v168
    %v1151 = vunpack.c.l.b16 %v169
    %v1152 = vunpack.c.l.b16 %v170
    %v1153 = vunpack.c.l.b16 %v171
    %v1154 = vunpack.c.l.b16 %v172
    %v1155 = vunpack.c.l.b16 %v173
    %v1156 = vunpack.c.l.b16 %v174
    %v1157 = vunpack.c.l.b16 %v175
    %v1158 = vunpack.c.l.b16 %v176
    %v1159 = vunpack.c.l.b16 %v177
    %v1160 = vunpack.c.l.b16 %v178
    %v1161 = vunpack.c.l.b16 %v179
    %v1162 = vunpack.c.l.b16 %v180
    %v1163 = vunpack.c.l.b16 %v181
    %v1164 = vunpack.c.l.b16 %v182
    %v1165 = vunpack.c.l.b16 %v183
    %v1166 = vunpack.c.l.b16 %v184
    %v1167 = vunpack.c.l.b16 %v185
    %v1168 = vunpack.c.l.b16 %v186
    %v1169 = vunpack.c.l.b16 %v187
    %v1170 = vunpack.c.l.b16 %v188
    %v1171 = vunpack.c.l.b16 %v189
    %v1172 = vunpack.c.l.b16 %v190
    %v1173 = vunpack.c.l.b16 %v191
    %v1174 = vunpack.c.l.b16 %v192
    %v1175 = vunpack.c.l.b16 %v193
    %v1176 = vunpack.c.l.b16 %v194
    %v1177 = vunpack.c.l.b16 %v195
    %v1178 = vunpack.c.l.b16 %v196
    %v1179 = vunpack.c.l.b16 %v197
    %v1180 = vunpack.c.l.b16 %v198
    %v1181 = vunpack.c.l.b16 %v199
    %v1182 = vunpack.c.l.b16 %v200
    %v1183 = vunpack.c.l.b16 %v201
    %v1184 = vunpack.c.l.b16 %v202
    %v1185 = vunpack.c.l.b16 %v203
    %v1186 = vunpack.c.l.b16 %v204
    %v1187 = vunpack.c.l.b16 %v205
    %v1188 = vunpack.c.l.b16 %v206
    %v1189 = vunpack.c.l.b16 %v207
    %v1190 = vunpack.c.l.b16 %v208
    %v1191 = vunpack.c.l.b16 %v209
    %v1192 = vunpack.c.l.b16 %v210
    %v1193 = vunpack.c.l.b16 %v211
    %v1194 = vunpack.c.l.b16 %v212
    %v1195 = vunpack.c.l.b16 %v213
    %v1196 = vunpack.c.l.b16 %v214
    %v1197 = vunpack.c.l.b16 %v215
    %v1198 = vunpack.c.l.b16 %v216
    %v1199 = vunpack.c.l.b16 %v217
    %v1200 = vunpack.c.l.b16 %v218
    %v1201 = vunpack.c.l.b16 %v219
    %v1202 = vunpack.c.l.b16 %v220
    %v1203 = vunpack.c.l.b16 %v221
    %v1204 = vunpack.c.l.b16 %v222
    %v1205 = vunpack.c.l.b16 %v223
    %v1206 = vunpack.c.l.b16 %v224
    %v1207 = vunpack.c.l.b16 %v225
    %v1208 = vunpack.c.l.b16 %v226
    %v1209 = vunpack.c.l.b16 %v227
    %v1210 = vunpack.c.l.b16 %v228
    %v1211 = vunpack.c.l.b16 %v229
    %v1212 = vunpack.c.l.b16 %v230
    %v1213 = vunpack.c.l.b16 %v231
    %v1214 = vunpack.c.l.b16 %v232
    %v1215 = vunpack.c.l.b16 %v233
    %v1216 = vunpack.c.l.b16 %v234
    %v1217 = vunpack.c.l.b16 %v235
    %v1218 = vunpack.c.l.b16 %v236
    %v1219 = vunpack.c.l.b16 %v237
    %v1220 = vunpack.c.l.b16 %v238
    %v1221 = vunpack.c.l.b16 %v239
    %v1222 = vunpack.c.l.b16 %v240
    %v1223 = vunpack.c.l.b16 %v241
    %v1224 = vunpack.c.l.b16 %v242
    %v1225 = vunpack.c.l.b16 %v243
    %v1226 = vunpack.c.l.b16 %v244
    %v1227 = vunpack.c.l.b16 %v245
    %v1228 = vunpack.c.l.b16 %v246
    %v1229 = vunpack.c.l.b16 %v247
    %v1230 = vunpack.c.l.b16 %v248
    %v1231 = vunpack.c.l.b16 %v249
    %v1232 = vunpack.c.l.b16 %v250
    %v1233 = vunpack.c.l.b16 %v251
    %v1234 = vunpack.c.l.b16 %v252
    %v1235 = vunpack.c.l.b16 %v253
    %v1236 = vunpack.c.l.b16 %v254
    %v1237 = vunpack.c.l.b16 %v255
    %v1238 = vunpack.c.l.b16 %v256
    %v1239 = vunpack.c.l.b16 %v257
    %v1240 = vunpack.c.l.b16 %v258
    %v1241 = vunpack.c.l.b16 %v259
    %v1242 = vunpack.c.l.b16 %v260
    %v1243 = vunpack.c.l.b16 %v261
    %v1244 = vunpack.c.l.b16 %v262
    %v1245 = vunpack.c.l.b16 %v263
    %v1246 = vunpack.c.l.b16 %v264
    %v1247 = vunpack.c.l.b16 %v265
    %v1248 = vunpack.c.l.b16 %v266
    %v1249 = vunpack.c.l.b16 %v267
    %v1250 = vpack.c.b16 %v1123, %v1122
    %v1251 = vpack.c.b16 %v1125, %v1124
    %v1252 = vpack.c.b16 %v1127, %v1126
    %v1253 = vpack.c.b16 %v1129, %v1128
    %v1254 = vpack.c.b16 %v1131, %v1130
    %v1255 = vpack.c.b16 %v1133, %v1132
    %v1256 = vpack.c.b16 %v1135, %v1134
    %v1257 = vpack.c.b16 %v1137, %v1136
    %v1258 = vpack.c.b16 %v1139, %v1138
    %v1259 = vpack.c.b16 %v1141, %v1140
    %v1260 = vpack.c.b16 %v1143, %v1142
    %v1261 = vpack.c.b16 %v1145, %v1144
    %v1262 = vpack.c.b16 %v1147, %v1146
    %v1263 = vpack.c.b16 %v1149, %v1148
    %v1264 = vpack.c.b16 %v1151, %v1150
    %v1265 = vpack.c.b16 %v1153, %v1152
    %v1266 = vpack.c.b16 %v1155, %v1154
    %v1267 = vpack.c.b16 %v1157, %v1156
    %v1268 = vpack.c.b16 %v1159, %v1158
    %v1269 = vpack.c.b16 %v1161, %v1160
    %v1270 = vpack.c.b16 %v1163, %v1162
    %v1271 = vpack.c.b16 %v1165, %v1164
    %v1272 = vpack.c.b16 %v1167, %v1166
    %v1273 = vpack.c.b16 %v1169, %v1168
    %v1274 = vpack.c.b16 %v1171, %v1170
    %v1275 = vpack.c.b16 %v1173, %v1172
    %v1276 = vpack.c.b16 %v1175, %v1174
    %v1277 = vpack.c.b16 %v1177, %v1176
    %v1278 = vpack.c.b16 %v1179, %v1178
    %v1279 = vpack.c.b16 %v1181, %v1180
    %v1280 = vpack.c.b16 %v1183, %v1182
    %v1281 = vpack.c.b16 %v1185, %v1184
    %v1282 = vpack.c.b16 %v1187, %v1186
    %v1283 = vpack.c.b16 %v1189, %v1188
    %v1284 = vpack.c.b16 %v1191, %v1190
    %v1285 = vpack.c.b16 %v1193, %v1192
    %v1286 = vpack.c.b16 %v1195, %v1194
    %v1287 = vpack.c.b16 %v1197, %v1196
    %v1288 = vpack.c.b16 %v1199, %v1198
    %v1289 = vpack.c.b16 %v1201, %v1200
    %v1290 = vpack.c.b16 %v1203, %v1202
    %v1291 = vpack.c.b16 %v1205, %v1204
    %v1292 = vpack.c.b16 %v1207, %v1206
    %v1293 = vpack.c.b16 %v1209, %v1208
    %v1294 = vpack.c.b16 %v1211, %v1210
    %v1295 = vpack.c.b16 %v1213, %v1212
    %v1296 = vpack.c.b16 %v1215, %v1214
    %v1297 = vpack.c.b16 %v1217, %v1216
    %v1298 = vpack.c.b16 %v1219, %v1218
    %v1299 = vpack.c.b16 %v1221, %v1220
    %v1300 = vpack.c.b16 %v1223, %v1222
    %v1301 = vpack.c.b16 %v1225, %v1224
    %v1302 = vpack.c.b16 %v1227, %v1226
    %v1303 = vpack.c.b16 %v1229, %v1228
    %v1304 = vpack.c.b16 %v1231, %v1230
    %v1305 = vpack.c.b16 %v1233, %v1232
    %v1306 = vpack.c.b16 %v1235, %v1234
    %v1307 = vpack.c.b16 %v1237, %v1236
    %v1308 = vpack.c.b16 %v1239, %v1238
    %v1309 = vpack.c.b16 %v1241, %v1240
    %v1310 = vpack.c.b16 %v1243, %v1242
    %v1311 = vpack.c.b16 %v1245, %v1244
    %v1312 = vpack.c.b16 %v1247, %v1246
    %v1313 = vpack.c.b16 %v1249, %v1248
    %1378 = vmatprep.subr.bf16.mxu0 0
    %1379 = vmatpush1.bf16.msra.mxu0 %v1257
    %1380 = vmatprep.subr.bf16.mxu0 0
    %1381 = vmatpush1.bf16.msra.mxu0 %v1256
    %1382 = vmatprep.subr.bf16.mxu0 0
    %1383 = vmatpush1.bf16.msra.mxu0 %v1255
    %1384 = vmatprep.subr.bf16.mxu0 0
    %1385 = vmatpush1.bf16.msra.mxu0 %v1254
    %1386 = vmatprep.subr.bf16.mxu0 0
    %1387 = vmatpush1.bf16.msra.mxu0 %v1253
    %1388 = vmatprep.subr.bf16.mxu0 0
    %1389 = vmatpush1.bf16.msra.mxu0 %v1252
    %1390 = vmatprep.subr.bf16.mxu0 0
    %1391 = vmatpush1.bf16.msra.mxu0 %v1251
    %1392 = vmatprep.subr.bf16.mxu0 0
    %1393 = vmatpush1.bf16.msra.mxu0 %v1250
    %1394 = vmatprep.subr.bf16.mxu0 0
    %1395 = vmatpush2.bf16.msra.mxu0 %v1265
    %1396 = vmatprep.subr.bf16.mxu0 0
    %1397 = vmatpush2.bf16.msra.mxu0 %v1264
    %1398 = vmatprep.subr.bf16.mxu0 0
    %1399 = vmatpush2.bf16.msra.mxu0 %v1263
    %1400 = vmatprep.subr.bf16.mxu0 0
    %1401 = vmatpush2.bf16.msra.mxu0 %v1262
    %1402 = vmatprep.subr.bf16.mxu0 0
    %1403 = vmatpush2.bf16.msra.mxu0 %v1261
    %1404 = vmatprep.subr.bf16.mxu0 0
    %1405 = vmatpush2.bf16.msra.mxu0 %v1260
    %1406 = vmatprep.subr.bf16.mxu0 0
    %1407 = vmatpush2.bf16.msra.mxu0 %v1259
    %1408 = vmatprep.subr.bf16.mxu0 0
    %1409 = vmatpush2.bf16.msra.mxu0 %v1258
    %1410 = vmatprep.mubr.bf16.mxu0 %v133
    %1411 = vmatmul.mubr.bf16.gmra.mxu0 %v132
    %v1412 = vpop.f32.mrf.mxu0
    %v1413 = vadd.f32 %v989, %v1412
    %v1414 = vpop.f32.mrf.mxu0
    %v1415 = vpop.f32.mrf.mxu0
    %v1416 = vpop.f32.mrf.mxu0
    %1417 = vdwg.mxu0
    %1418 = vmatprep.subr.bf16.mxu0 0
    %1419 = vmatpush1.bf16.msra.mxu0 %v1273
    %1420 = vmatprep.subr.bf16.mxu0 0
    %1421 = vmatpush1.bf16.msra.mxu0 %v1272
    %1422 = vmatprep.subr.bf16.mxu0 0
    %1423 = vmatpush1.bf16.msra.mxu0 %v1271
    %1424 = vmatprep.subr.bf16.mxu0 0
    %1425 = vmatpush1.bf16.msra.mxu0 %v1270
    %1426 = vmatprep.subr.bf16.mxu0 0
    %1427 = vmatpush1.bf16.msra.mxu0 %v1269
    %1428 = vmatprep.subr.bf16.mxu0 0
    %1429 = vmatpush1.bf16.msra.mxu0 %v1268
    %1430 = vmatprep.subr.bf16.mxu0 0
    %1431 = vmatpush1.bf16.msra.mxu0 %v1267
    %1432 = vmatprep.subr.bf16.mxu0 0
    %1433 = vmatpush1.bf16.msra.mxu0 %v1266
    %1434 = vmatprep.subr.bf16.mxu0 0
    %1435 = vmatpush2.bf16.msra.mxu0 %v1281
    %1436 = vmatprep.subr.bf16.mxu0 0
    %1437 = vmatpush2.bf16.msra.mxu0 %v1280
    %1438 = vmatprep.subr.bf16.mxu0 0
    %1439 = vmatpush2.bf16.msra.mxu0 %v1279
    %1440 = vmatprep.subr.bf16.mxu0 0
    %1441 = vmatpush2.bf16.msra.mxu0 %v1278
    %1442 = vmatprep.subr.bf16.mxu0 0
    %1443 = vmatpush2.bf16.msra.mxu0 %v1277
    %1444 = vmatprep.subr.bf16.mxu0 0
    %1445 = vmatpush2.bf16.msra.mxu0 %v1276
    %1446 = vmatprep.subr.bf16.mxu0 0
    %1447 = vmatpush2.bf16.msra.mxu0 %v1275
    %1448 = vmatprep.subr.bf16.mxu0 0
    %1449 = vmatpush2.bf16.msra.mxu0 %v1274
    %1450 = vmatprep.mubr.bf16.mxu0 %v135
    %1451 = vmatmul.mubr.bf16.gmra.mxu0 %v134
    %v1452 = vpop.f32.mrf.mxu0
    %v1453 = vadd.f32 %v1413, %v1452
    %v1454 = vpop.f32.mrf.mxu0
    %v1455 = vpop.f32.mrf.mxu0
    %v1456 = vpop.f32.mrf.mxu0
    %1457 = vdwg.mxu0
    %1458 = vmatprep.subr.bf16.mxu0 0
    %1459 = vmatpush1.bf16.msra.mxu0 %v1289
    %1460 = vmatprep.subr.bf16.mxu0 0
    %1461 = vmatpush1.bf16.msra.mxu0 %v1288
    %1462 = vmatprep.subr.bf16.mxu0 0
    %1463 = vmatpush1.bf16.msra.mxu0 %v1287
    %1464 = vmatprep.subr.bf16.mxu0 0
    %1465 = vmatpush1.bf16.msra.mxu0 %v1286
    %1466 = vmatprep.subr.bf16.mxu0 0
    %1467 = vmatpush1.bf16.msra.mxu0 %v1285
    %1468 = vmatprep.subr.bf16.mxu0 0
    %1469 = vmatpush1.bf16.msra.mxu0 %v1284
    %1470 = vmatprep.subr.bf16.mxu0 0
    %1471 = vmatpush1.bf16.msra.mxu0 %v1283
    %1472 = vmatprep.subr.bf16.mxu0 0
    %1473 = vmatpush1.bf16.msra.mxu0 %v1282
    %1474 = vmatprep.subr.bf16.mxu0 0
    %1475 = vmatpush2.bf16.msra.mxu0 %v1297
    %1476 = vmatprep.subr.bf16.mxu0 0
    %1477 = vmatpush2.bf16.msra.mxu0 %v1296
    %1478 = vmatprep.subr.bf16.mxu0 0
    %1479 = vmatpush2.bf16.msra.mxu0 %v1295
    %1480 = vmatprep.subr.bf16.mxu0 0
    %1481 = vmatpush2.bf16.msra.mxu0 %v1294
    %1482 = vmatprep.subr.bf16.mxu0 0
    %1483 = vmatpush2.bf16.msra.mxu0 %v1293
    %1484 = vmatprep.subr.bf16.mxu0 0
    %1485 = vmatpush2.bf16.msra.mxu0 %v1292
    %1486 = vmatprep.subr.bf16.mxu0 0
    %1487 = vmatpush2.bf16.msra.mxu0 %v1291
    %1488 = vmatprep.subr.bf16.mxu0 0
    %1489 = vmatpush2.bf16.msra.mxu0 %v1290
    %1490 = vmatprep.mubr.bf16.mxu0 %v137
    %1491 = vmatmul.mubr.bf16.gmra.mxu0 %v136
    %v1492 = vpop.f32.mrf.mxu0
    %v1493 = vadd.f32 %v1453, %v1492
    %v1494 = vpop.f32.mrf.mxu0
    %v1495 = vpop.f32.mrf.mxu0
    %v1496 = vpop.f32.mrf.mxu0
    %1497 = vdwg.mxu0
    %1498 = vmatprep.subr.bf16.mxu0 0
    %1499 = vmatpush1.bf16.msra.mxu0 %v1305
    %1500 = vmatprep.subr.bf16.mxu0 0
    %1501 = vmatpush1.bf16.msra.mxu0 %v1304
    %1502 = vmatprep.subr.bf16.mxu0 0
    %1503 = vmatpush1.bf16.msra.mxu0 %v1303
    %1504 = vmatprep.subr.bf16.mxu0 0
    %1505 = vmatpush1.bf16.msra.mxu0 %v1302
    %1506 = vmatprep.subr.bf16.mxu0 0
    %1507 = vmatpush1.bf16.msra.mxu0 %v1301
    %1508 = vmatprep.subr.bf16.mxu0 0
    %1509 = vmatpush1.bf16.msra.mxu0 %v1300
    %1510 = vmatprep.subr.bf16.mxu0 0
    %1511 = vmatpush1.bf16.msra.mxu0 %v1299
    %1512 = vmatprep.subr.bf16.mxu0 0
    %1513 = vmatpush1.bf16.msra.mxu0 %v1298
    %1514 = vmatprep.subr.bf16.mxu0 0
    %1515 = vmatpush2.bf16.msra.mxu0 %v1313
    %1516 = vmatprep.subr.bf16.mxu0 0
    %1517 = vmatpush2.bf16.msra.mxu0 %v1312
    %1518 = vmatprep.subr.bf16.mxu0 0
    %1519 = vmatpush2.bf16.msra.mxu0 %v1311
    %1520 = vmatprep.subr.bf16.mxu0 0
    %1521 = vmatpush2.bf16.msra.mxu0 %v1310
    %1522 = vmatprep.subr.bf16.mxu0 0
    %1523 = vmatpush2.bf16.msra.mxu0 %v1309
    %1524 = vmatprep.subr.bf16.mxu0 0
    %1525 = vmatpush2.bf16.msra.mxu0 %v1308
    %1526 = vmatprep.subr.bf16.mxu0 0
    %1527 = vmatpush2.bf16.msra.mxu0 %v1307
    %1528 = vmatprep.subr.bf16.mxu0 0
    %1529 = vmatpush2.bf16.msra.mxu0 %v1306
    %1530 = vmatprep.mubr.bf16.mxu0 %v139
    %1531 = vmatmul.mubr.bf16.gmra.mxu0 %v138
    %v1532 = vpop.f32.mrf.mxu0
    %v1533 = vadd.f32 %v1493, %v1532
    %v1534 = vpop.f32.mrf.mxu0
    %v1535 = vpop.f32.mrf.mxu0
    %v1536 = vpop.f32.mrf.mxu0
    %1537 = vdwg.mxu0
    %v1538 = vadd.f32 %v85, %v1533
    %1539 = vst [vmem:[#allocation10] sm:$0x3] %v1538
    // Predicated region
    $region42: #{tpu_custom_call.1} parent=1 // pred_check
      _
    $region43: #{tpu_custom_call.1} parent=1 // pred_check_branch
      %1541 = sbr.rel (0) target = $region45
    $region44: #{tpu_custom_call.1} parent=1 // pred_region
      %s1543 = ssub.s32 32, 32
      %1544 = vsyncadd [#allocation4], %s1543
      %s1546 = sshll.u32 [#allocation10], 4
      %s1547 = int_to_ptr.vmem [resolvable:$true] %s1546
      %1549 = dma.vmem_to_hbm [thread:$0]  %s1547, 32, %s5, [#allocation4]
    $region45: #{tpu_custom_call.1} parent=1 // pred_fallthru
      _
    // Predicated region
    $region46: #{tpu_custom_call.1} parent=1 // pred_check
      _
    $region47: #{tpu_custom_call.1} parent=1 // pred_check_branch
      %1551 = sbr.rel (0) target = $region49
    $region48: #{tpu_custom_call.1} parent=1 // pred_region
      %1552 = dma.done [#allocation4], 32
    $region49: #{tpu_custom_call.1} parent=1 // pred_fallthru
      _
    %1553 = vsyncpa [#allocation3], 1
    %1554 = vsyncpa [#allocation6], 1
    %1555 = vsyncpa [#allocation9], 1
    %1556 = vsyncpa [#allocation4], 1

</llo_original>
